<compile_context>
chip_gen: v7x
topology: tpu7x:2x2x1
jax: 0.10.0
libtpu: 0.0.40
codegen_flags: <defaults>
</compile_context>

<pallas_src>
import jax
import jax.numpy as jnp
import numpy as np
from jax.experimental import pallas as pl
from jax.experimental.pallas import tpu as pltpu

# ---------------- model config (mirrors the PyTorch module) ----------------
CONV_CONFIG = {"num_channels": 50, "kernel_sizes": [1, 2, 3]}
KERNEL_SIZES = CONV_CONFIG["kernel_sizes"]
NUM_CHANNELS = CONV_CONFIG["num_channels"]
OUTPUT_SIZE = 2
DROPOUT_P = 0.8          # eval-mode identity (see TODO above)

# small, forward-consistent shapes
BATCH = 2
SEQ_LEN = 16
VOCAB = 100
EMB_DIM = 32

# packed-layout constants
TAPS = max(KERNEL_SIZES)                     # 3 conv taps max
VP = 128                                     # vocab padded 100 -> 128 lanes
CP = 64                                      # channels padded 50 -> 64 lanes
NG = len(KERNEL_SIZES) * CP                  # 192 packed feature lanes
GROUP_ORDER = sorted(KERNEL_SIZES, reverse=True)   # [3, 2, 1]: widest kernel
                                                   # first so taps 1/2 write a
                                                   # lane prefix (0:128)


def _textcnn_kernel(ids3_ref, w0_ref, w12_ref, tail_ref, mask_ref, out_ref):
    """Whole TextCNN forward in one invocation (all operands VMEM-resident).

    ids3_ref : (B*L, 3)     int32  token id at flat position r, r+1, r+2
    w0_ref   : (VP, NG)     f32    embedding-folded tap-0 conv weights (all groups)
    w12_ref  : (2*VP, 2*CP) f32    taps 1,2 K-stacked; only k>=2 groups (lanes 0:128)
    tail_ref : (8, NG)      f32    row0 = conv bias, rows 1:1+OUT = linear W,
                                   row (1+OUT)[:OUT] = linear bias
    mask_ref : (L, NG)      f32    1.0 where the conv window fits the sequence
    out_ref  : (B, OUT)     f32    log_softmax output
    """
    B, OUT = out_ref.shape
    BL = ids3_ref.shape[0]
    L, NG_ = mask_ref.shape
    VP_ = w0_ref.shape[0]
    W12N = w12_ref.shape[1]

    # ---- three (BL, VP) one-hots off ONE shared lane-iota (feedback #1)
    lane = jax.lax.broadcasted_iota(jnp.int32, (BL, VP_), 1)
    oh0 = (lane == ids3_ref[:, 0:1]).astype(jnp.float32)
    oh1 = (lane == ids3_ref[:, 1:2]).astype(jnp.float32)
    oh2 = (lane == ids3_ref[:, 2:3]).astype(jnp.float32)

    # ---- MXU: embedding gather + all conv taps (feedback #4: zero blocks
    # trimmed from the packed operand; tap 0 hits all 192 lanes, taps 1+2 are
    # one K-stacked dot producing only the k=3/k=2 lanes 0:128).
    s_all = jnp.dot(oh0, w0_ref[...], preferred_element_type=jnp.float32)   # (BL, NG)
    oh12 = jnp.concatenate([oh1, oh2], axis=1)                              # (BL, 2*VP)
    s12 = jnp.dot(oh12, w12_ref[...], preferred_element_type=jnp.float32)   # (BL, 2*CP)
    s = jnp.concatenate([s_all[:, :W12N] + s12, s_all[:, W12N:]], axis=1)   # (BL, NG)

    # conv bias + ReLU, then the host-precomputed validity mask (feedback #2).
    # The mask MUST stay post-ReLU: valid values are >= 0 so a masked 0.0 can
    # never beat a valid max.
    s = jnp.maximum(s + tail_ref[0:1, :], 0.0)
    s = s.reshape(B, L, NG_) * mask_ref[...][None, :, :]
    pooled = jnp.max(s, axis=1)                                             # (B, NG)

    # (dropout p=0.8 = identity in eval mode)

    # ---- lane-dense linear on VPU/XLU (feedback #3), then log_softmax
    w_lin = tail_ref[1:1 + OUT, :]                                          # (OUT, NG)
    logits = jnp.sum(pooled[:, None, :] * w_lin[None, :, :], axis=-1)       # (B, OUT)
    logits = logits + tail_ref[1 + OUT:2 + OUT, 0:OUT]

    m = jnp.max(logits, axis=-1, keepdims=True)
    z = logits - m
    out_ref[...] = z - jnp.log(jnp.sum(jnp.exp(z), axis=-1, keepdims=True))


@jax.jit
def textcnn_forward(input_seq, packed):
    """input_seq: (B, L) int32 token ids; packed: kernel-ready parameter dict."""
    B, L = input_seq.shape
    BL = B * L
    ids = input_seq.reshape(BL).astype(jnp.int32)
    # ids3[r, tau] = token id at flat position r + tau.  Wrapped / cross-batch
    # rows only feed conv positions with t > L - k, which the mask kills.
    ids3 = jnp.stack([jnp.roll(ids, -tau) for tau in range(TAPS)], axis=1)

    # Compile-time validity mask (feedback #2): position t valid for kernel k
    # iff t <= L - k.  Pure numpy -> becomes a jaxpr constant.
    mask_np = np.zeros((L, NG), np.float32)
    for g, k in enumerate(GROUP_ORDER):
        mask_np[:, g * CP:(g + 1) * CP] = (np.arange(L) <= L - k)[:, None]
    mask = jnp.asarray(mask_np)

    vmem = pl.BlockSpec(memory_space=pltpu.MemorySpace.VMEM)
    return pl.pallas_call(
        _textcnn_kernel,
        out_shape=jax.ShapeDtypeStruct((B, OUTPUT_SIZE), jnp.float32),
        in_specs=[vmem] * 5,
        out_specs=vmem,
    )(ids3, packed["w0"], packed["w12"], packed["tail"], mask)


def init_params(key):
    """PyTorch-layout parameters (Conv1d weight (C, E, k), etc.)."""
    keys = jax.random.split(key, 9)
    params = {"embedding":
              jax.random.normal(keys[0], (VOCAB, EMB_DIM), jnp.float32) * 0.1}
    for i, k in enumerate(KERNEL_SIZES):
        params[f"conv_w{k}"] = jax.random.normal(
            keys[1 + i], (NUM_CHANNELS, EMB_DIM, k), jnp.float32) * 0.05
        params[f"conv_b{k}"] = jax.random.normal(
            keys[4 + i], (NUM_CHANNELS,), jnp.float32) * 0.05
    params["lin_w"] = jax.random.normal(
        keys[7], (OUTPUT_SIZE, NUM_CHANNELS * len(KERNEL_SIZES)), jnp.float32) * 0.05
    params["lin_b"] = jax.random.normal(keys[8], (OUTPUT_SIZE,), jnp.float32) * 0.05
    return params


def pack_params(params):
    """One-time fold of embedding table + conv weights into kernel operands."""
    hi = jax.lax.Precision.HIGHEST
    table = jnp.zeros((VP, EMB_DIM), jnp.float32).at[:VOCAB, :].set(
        params["embedding"])

    def fold(k, tau):
        # (VP, C): fold[v, c] = sum_e table[v, e] * conv_w{k}[c, e, tau]
        return jnp.einsum("ve,ce->vc", table, params[f"conv_w{k}"][:, :, tau],
                          precision=hi)

    # Tap-0 block: every group has a tap 0 -> full NG output lanes.
    # Lane layout (GROUP_ORDER): k=3 -> 0:64, k=2 -> 64:128, k=1 -> 128:192.
    w0 = jnp.zeros((VP, NG), jnp.float32)
    for g, k in enumerate(GROUP_ORDER):
        w0 = w0.at[:, g * CP:g * CP + NUM_CHANNELS].set(fold(k, 0))

    # Taps 1 and 2, K-stacked (rows 0:VP = tap 1, rows VP:2VP = tap 2), only
    # for the k=3 / k=2 groups (output lanes 0:2*CP).  The k=1 group and the
    # (k=2, tap2) block are structurally zero and never shipped (feedback #4).
    w12 = jnp.zeros((2 * VP, 2 * CP), jnp.float32)
    for g, k in enumerate(GROUP_ORDER[:2]):
        if k >= 2:
            w12 = w12.at[0:VP, g * CP:g * CP + NUM_CHANNELS].set(fold(k, 1))
        if k >= 3:
            w12 = w12.at[VP:2 * VP, g * CP:g * CP + NUM_CHANNELS].set(fold(k, 2))

    # tail: row 0 = conv bias; rows 1:1+OUT = lane-dense linear weight rows
    # (torch lin_w columns re-ordered onto the packed k=3,2,1 lane layout);
    # row (1+OUT)[:OUT] = linear bias.
    tail = jnp.zeros((8, NG), jnp.float32)
    for g, k in enumerate(GROUP_ORDER):
        j = KERNEL_SIZES.index(k)   # this group's position in torch's concat
        tail = tail.at[0, g * CP:g * CP + NUM_CHANNELS].set(params[f"conv_b{k}"])
        tail = tail.at[1:1 + OUTPUT_SIZE, g * CP:g * CP + NUM_CHANNELS].set(
            params["lin_w"][:, j * NUM_CHANNELS:(j + 1) * NUM_CHANNELS])
    tail = tail.at[1 + OUTPUT_SIZE, :OUTPUT_SIZE].set(params["lin_b"])

    return {"w0": w0, "w12": w12, "tail": tail}


def reference_forward(input_seq, params):
    """Pure-JAX reference mirroring the PyTorch forward (eval mode)."""
    hi = jax.lax.Precision.HIGHEST
    emb = jnp.take(params["embedding"], input_seq, axis=0)   # (B, L, E)
    B, L, _ = emb.shape
    pooled = []
    for k in KERNEL_SIZES:
        w = params[f"conv_w{k}"]          # (C, E, k)
        b = params[f"conv_b{k}"]          # (C,)
        l_out = L - k + 1
        s = jnp.zeros((B, l_out, NUM_CHANNELS), jnp.float32)
        for tau in range(k):
            s = s + jnp.einsum("ble,ce->blc", emb[:, tau:tau + l_out, :],
                               w[:, :, tau], precision=hi)
        s = jnp.maximum(s + b[None, None, :], 0.0)
        pooled.append(jnp.max(s, axis=1))
    feat = jnp.concatenate(pooled, axis=1)                   # (B, 3C)
    logits = jnp.dot(feat, params["lin_w"].T, precision=hi) + params["lin_b"][None, :]
    return jax.nn.log_softmax(logits, axis=-1)


if __name__ == "__main__":
    key = jax.random.PRNGKey(0)
    k_param, k_data = jax.random.split(key)
    params = init_params(k_param)
    packed = pack_params(params)
    input_seq = jax.random.randint(k_data, (BATCH, SEQ_LEN), 0, VOCAB,
                                   dtype=jnp.int32)

    out = jax.block_until_ready(textcnn_forward(input_seq, packed))
    ref = jax.block_until_ready(reference_forward(input_seq, params))
    np.testing.assert_allclose(np.asarray(out), np.asarray(ref),
                               rtol=1e-5, atol=1e-5)
    print("KERNEL_OK")
</pallas_src>

<mosaic_0001>
module attributes {stable_mosaic.version = 11 : i64} {
  func.func @_textcnn_kernel(%arg0: memref<32x3xi32, #tpu.memory_space<vmem>>, %arg1: memref<128x192xf32, #tpu.memory_space<vmem>>, %arg2: memref<256x128xf32, #tpu.memory_space<vmem>>, %arg3: memref<8x192xf32, #tpu.memory_space<vmem>>, %arg4: memref<16x192xf32, #tpu.memory_space<vmem>>, %arg5: memref<2x2xf32, #tpu.memory_space<vmem>>) attributes {dimension_semantics = [], scalar_prefetch = 0 : i64, scratch_operands = 0 : i64, tpu.core_type = #tpu.core_type<tc>} {
    %0 = tpu.iota {dimensions = array<i32: 1>} : vector<32x128xi32>
    %c0 = arith.constant 0 : index
    %c0_0 = arith.constant 0 : index
    %1 = vector.load %arg0[%c0, %c0_0] : memref<32x3xi32, #tpu.memory_space<vmem>>, vector<32x1xi32>
    %2 = vector.broadcast %1 : vector<32x1xi32> to vector<32x128xi32>
    %3 = arith.cmpi eq, %0, %2 : vector<32x128xi32>
    %4 = arith.extui %3 : vector<32x128xi1> to vector<32x128xi32>
    %5 = arith.sitofp %4 : vector<32x128xi32> to vector<32x128xf32>
    %c0_1 = arith.constant 0 : index
    %c1 = arith.constant 1 : index
    %6 = vector.load %arg0[%c0_1, %c1] : memref<32x3xi32, #tpu.memory_space<vmem>>, vector<32x1xi32>
    %7 = vector.broadcast %6 : vector<32x1xi32> to vector<32x128xi32>
    %8 = arith.cmpi eq, %0, %7 : vector<32x128xi32>
    %9 = arith.extui %8 : vector<32x128xi1> to vector<32x128xi32>
    %10 = arith.sitofp %9 : vector<32x128xi32> to vector<32x128xf32>
    %c0_2 = arith.constant 0 : index
    %c2 = arith.constant 2 : index
    %11 = vector.load %arg0[%c0_2, %c2] : memref<32x3xi32, #tpu.memory_space<vmem>>, vector<32x1xi32>
    %12 = vector.broadcast %11 : vector<32x1xi32> to vector<32x128xi32>
    %13 = arith.cmpi eq, %0, %12 : vector<32x128xi32>
    %14 = arith.extui %13 : vector<32x128xi1> to vector<32x128xi32>
    %15 = arith.sitofp %14 : vector<32x128xi32> to vector<32x128xf32>
    %c0_3 = arith.constant 0 : index
    %c0_4 = arith.constant 0 : index
    %16 = vector.load %arg1[%c0_3, %c0_4] : memref<128x192xf32, #tpu.memory_space<vmem>>, vector<128x192xf32>
    %cst = arith.constant dense<0.000000e+00> : vector<32x192xf32>
    %17 = tpu.matmul %5, %16, %cst {dimension_numbers = #tpu.dot_dimension_numbers<[1], [0], [0], [1], [0, 0, 1, 1], [], []>} : vector<32x128xf32>, vector<128x192xf32>, vector<32x192xf32> -> vector<32x192xf32>
    %18 = tpu.concatenate %10, %15 in 1 : vector<32x128xf32>, vector<32x128xf32> -> vector<32x256xf32>
    %c0_5 = arith.constant 0 : index
    %c0_6 = arith.constant 0 : index
    %19 = vector.load %arg2[%c0_5, %c0_6] : memref<256x128xf32, #tpu.memory_space<vmem>>, vector<256x128xf32>
    %cst_7 = arith.constant dense<0.000000e+00> : vector<32x128xf32>
    %20 = tpu.matmul %18, %19, %cst_7 {dimension_numbers = #tpu.dot_dimension_numbers<[1], [0], [0], [1], [0, 0, 1, 1], [], []>} : vector<32x256xf32>, vector<256x128xf32>, vector<32x128xf32> -> vector<32x128xf32>
    %21 = vector.extract_strided_slice %17 {offsets = [0, 0], sizes = [32, 128], strides = [1, 1]} : vector<32x192xf32> to vector<32x128xf32>
    %22 = arith.addf %21, %20 : vector<32x128xf32>
    %23 = vector.extract_strided_slice %17 {offsets = [0, 128], sizes = [32, 64], strides = [1, 1]} : vector<32x192xf32> to vector<32x64xf32>
    %24 = tpu.concatenate %22, %23 in 1 : vector<32x128xf32>, vector<32x64xf32> -> vector<32x192xf32>
    %c0_8 = arith.constant 0 : index
    %c0_9 = arith.constant 0 : index
    %25 = vector.load %arg3[%c0_8, %c0_9] : memref<8x192xf32, #tpu.memory_space<vmem>>, vector<1x192xf32>
    %26 = vector.broadcast %25 : vector<1x192xf32> to vector<32x192xf32>
    %27 = arith.addf %24, %26 : vector<32x192xf32>
    %cst_10 = arith.constant 0.000000e+00 : f32
    %28 = vector.broadcast %cst_10 : f32 to vector<32x192xf32>
    %29 = arith.maximumf %27, %28 : vector<32x192xf32>
    %30 = vector.shape_cast %29 : vector<32x192xf32> to vector<2x16x192xf32>
    %c0_11 = arith.constant 0 : index
    %c0_12 = arith.constant 0 : index
    %31 = vector.load %arg4[%c0_11, %c0_12] : memref<16x192xf32, #tpu.memory_space<vmem>>, vector<16x192xf32>
    %32 = vector.shape_cast %31 : vector<16x192xf32> to vector<1x16x192xf32>
    %33 = vector.broadcast %32 : vector<1x16x192xf32> to vector<2x16x192xf32>
    %34 = arith.mulf %30, %33 : vector<2x16x192xf32>
    %cst_13 = arith.constant dense<0xFF800000> : vector<2x192xf32>
    %35 = vector.multi_reduction <maximumf>, %34, %cst_13 [1] : vector<2x16x192xf32> to vector<2x192xf32>
    %c1_14 = arith.constant 1 : index
    %c0_15 = arith.constant 0 : index
    %36 = vector.load %arg3[%c1_14, %c0_15] : memref<8x192xf32, #tpu.memory_space<vmem>>, vector<2x192xf32>
    %37 = vector.shape_cast %35 : vector<2x192xf32> to vector<2x1x192xf32>
    %38 = vector.shape_cast %36 : vector<2x192xf32> to vector<1x2x192xf32>
    %39 = vector.broadcast %37 : vector<2x1x192xf32> to vector<2x2x192xf32>
    %40 = vector.broadcast %38 : vector<1x2x192xf32> to vector<2x2x192xf32>
    %41 = arith.mulf %39, %40 : vector<2x2x192xf32>
    %cst_16 = arith.constant dense<0.000000e+00> : vector<2x2xf32>
    %42 = vector.multi_reduction <add>, %41, %cst_16 [2] : vector<2x2x192xf32> to vector<2x2xf32>
    %c3 = arith.constant 3 : index
    %c0_17 = arith.constant 0 : index
    %43 = vector.load %arg3[%c3, %c0_17] : memref<8x192xf32, #tpu.memory_space<vmem>>, vector<1x2xf32>
    %44 = vector.broadcast %43 : vector<1x2xf32> to vector<2x2xf32>
    %45 = arith.addf %42, %44 : vector<2x2xf32>
    %cst_18 = arith.constant dense<0xFF800000> : vector<2xf32>
    %46 = vector.multi_reduction <maximumf>, %45, %cst_18 [1] : vector<2x2xf32> to vector<2xf32>
    %47 = vector.shape_cast %46 : vector<2xf32> to vector<2x1xf32>
    %48 = vector.broadcast %47 : vector<2x1xf32> to vector<2x2xf32>
    %49 = arith.subf %45, %48 : vector<2x2xf32>
    %50 = math.exp %49 : vector<2x2xf32>
    %cst_19 = arith.constant dense<0.000000e+00> : vector<2xf32>
    %51 = vector.multi_reduction <add>, %50, %cst_19 [1] : vector<2x2xf32> to vector<2xf32>
    %52 = vector.shape_cast %51 : vector<2xf32> to vector<2x1xf32>
    %53 = math.log %52 : vector<2x1xf32>
    %54 = vector.broadcast %53 : vector<2x1xf32> to vector<2x2xf32>
    %55 = arith.subf %49, %54 : vector<2x2xf32>
    %c0_20 = arith.constant 0 : index
    %c0_21 = arith.constant 0 : index
    %56 = vector.load %arg5[%c0_20, %c0_21] : memref<2x2xf32, #tpu.memory_space<vmem>>, vector<2x2xf32>
    tpu.vector_store %arg5[%c0_20, %c0_21], %55 {strides = array<i32>} : memref<2x2xf32, #tpu.memory_space<vmem>>, vector<2x2xf32>,
    return
  }
}

</mosaic_0001>

<llo_original>
// kernel: textcnn_forward.1
$region0: #{textcnn_forward.1}
  #allocation0 [shape = 'u32[]', space=smem, size = 0x4, offset = 0x4, fixed_abs, tag = 'smem constant byte address 0x4 - core index']
  #allocation1 [shape = 'u32[144,128]{1,0:T(1,128)}', space=vmem, size = 0x12000, scoped, tag = 'internal scratch']
  %s0 = inlined_call_operand.vmem [shape: s32[32,3], index: 0, kind: input, shape index: {}]
  %s1 = inlined_call_operand.vmem [shape: f32[128,192], index: 1, kind: input, shape index: {}]
  %s2 = inlined_call_operand.vmem [shape: f32[256,128], index: 2, kind: input, shape index: {}]
  %s3 = inlined_call_operand.vmem [shape: f32[8,192], index: 3, kind: input, shape index: {}]
  %s4 = inlined_call_operand.vmem [shape: f32[16,192], index: 4, kind: input, shape index: {}]
  %s5 = inlined_call_operand.hbm [shape: f32[2,2], index: 5, kind: output, shape index: {}]
  %s6 = sld [smem:[#allocation0]]
  $region30: #{textcnn_forward.1} parent=0
    _
  %s8 = ssub.s32 1, %s6
  %s9 = scalar_select 0, %s8, %s6
  $region1: #{textcnn_forward.1} parent=0
    #allocation2 [shape = 'u8[1024]{0}', space=vmem, size = 0x400, scoped, tag = 'output window, operand 0, single buffered']
    #allocation3 [shape = 's32[1]{0}', space=sflag, size = 0x4, scoped, tag = 'scoped memory for textcnn_forward.1']
    %10 = vsyncpa [#allocation3], 0
    // Predicated region
    $region2: #{textcnn_forward.1} parent=1 // pred_check
      _
    $region3: #{textcnn_forward.1} parent=1 // pred_check_branch
      %12 = sbr.rel (0) target = $region5
    $region4: #{textcnn_forward.1} parent=1 // pred_region
      _
    $region5: #{textcnn_forward.1} parent=1 // pred_fallthru
      _
    // Predicated region
    $region6: #{textcnn_forward.1} parent=1 // pred_check
      _
    $region7: #{textcnn_forward.1} parent=1 // pred_check_branch
      %14 = sbr.rel (0) target = $region9
    $region8: #{textcnn_forward.1} parent=1 // pred_region
      _
    $region9: #{textcnn_forward.1} parent=1 // pred_fallthru
      _
    // Predicated region
    $region10: #{textcnn_forward.1} parent=1 // pred_check
      _
    $region11: #{textcnn_forward.1} parent=1 // pred_check_branch
      %16 = sbr.rel (0) target = $region13
    $region12: #{textcnn_forward.1} parent=1 // pred_region
      _
    $region13: #{textcnn_forward.1} parent=1 // pred_fallthru
      _
    // Predicated region
    $region14: #{textcnn_forward.1} parent=1 // pred_check
      _
    $region15: #{textcnn_forward.1} parent=1 // pred_check_branch
      %18 = sbr.rel (0) target = $region17
    $region16: #{textcnn_forward.1} parent=1 // pred_region
      _
    $region17: #{textcnn_forward.1} parent=1 // pred_fallthru
      _
    // Predicated region
    $region18: #{textcnn_forward.1} parent=1 // pred_check
      _
    $region19: #{textcnn_forward.1} parent=1 // pred_check_branch
      %20 = sbr.rel (0) target = $region21
    $region20: #{textcnn_forward.1} parent=1 // pred_region
      _
    $region21: #{textcnn_forward.1} parent=1 // pred_fallthru
      _
    %v21 = vlaneseq
    %v22 = vand.u32 %v21, 127
    %v23 = vld [vmem:[%s0] sm:$0xff]
    %v24 = vld [vmem:[%s0 + $0x8] sm:$0xff]
    %v25 = vld [vmem:[%s0 + $0x10] sm:$0xff]
    %v26 = vld [vmem:[%s0 + $0x18] sm:$0xff]
    %27 = vset.pattern.permute.xlu0 0
    %28 = vperm.xlu0 %27, %v23
    %v29 = vpop.permute.xlu0 %28
    %30 = vset.pattern.permute.xlu0 0
    %31 = vperm.xlu0 %30, %v24
    %v32 = vpop.permute.xlu0 %31
    %33 = vset.pattern.permute.xlu0 0
    %34 = vperm.xlu0 %33, %v25
    %v35 = vpop.permute.xlu0 %34
    %36 = vset.pattern.permute.xlu0 0
    %37 = vperm.xlu0 %36, %v26
    %v38 = vpop.permute.xlu0 %37
    %vm39 = vcmp.eq.s32.totalorder %v22, %v29
    %vm40 = vcmp.eq.s32.totalorder %v22, %v32
    %vm41 = vcmp.eq.s32.totalorder %v22, %v35
    %vm42 = vcmp.eq.s32.totalorder %v22, %v38
    %v43 = vsel %vm39, 1, 0
    %v44 = vsel %vm40, 1, 0
    %v45 = vsel %vm41, 1, 0
    %v46 = vsel %vm42, 1, 0
    %v47 = vcvt.s32.f32 %v43
    %v48 = vcvt.s32.f32 %v44
    %v49 = vcvt.s32.f32 %v45
    %v50 = vcvt.s32.f32 %v46
    %51 = vset.pattern.permute.xlu0 1
    %52 = vperm.xlu0 %51, %v23
    %v53 = vpop.permute.xlu0 %52
    %54 = vset.pattern.permute.xlu0 1
    %55 = vperm.xlu0 %54, %v24
    %v56 = vpop.permute.xlu0 %55
    %57 = vset.pattern.permute.xlu0 1
    %58 = vperm.xlu0 %57, %v25
    %v59 = vpop.permute.xlu0 %58
    %60 = vset.pattern.permute.xlu0 1
    %61 = vperm.xlu0 %60, %v26
    %v62 = vpop.permute.xlu0 %61
    %vm63 = vcmp.eq.s32.totalorder %v22, %v53
    %vm64 = vcmp.eq.s32.totalorder %v22, %v56
    %vm65 = vcmp.eq.s32.totalorder %v22, %v59
    %vm66 = vcmp.eq.s32.totalorder %v22, %v62
    %v67 = vsel %vm63, 1, 0
    %v68 = vsel %vm64, 1, 0
    %v69 = vsel %vm65, 1, 0
    %v70 = vsel %vm66, 1, 0
    %v71 = vcvt.s32.f32 %v67
    %v72 = vcvt.s32.f32 %v68
    %v73 = vcvt.s32.f32 %v69
    %v74 = vcvt.s32.f32 %v70
    %75 = vset.pattern.permute.xlu0 2
    %76 = vperm.xlu0 %75, %v23
    %v77 = vpop.permute.xlu0 %76
    %78 = vset.pattern.permute.xlu0 2
    %79 = vperm.xlu0 %78, %v24
    %v80 = vpop.permute.xlu0 %79
    %81 = vset.pattern.permute.xlu0 2
    %82 = vperm.xlu0 %81, %v25
    %v83 = vpop.permute.xlu0 %82
    %84 = vset.pattern.permute.xlu0 2
    %85 = vperm.xlu0 %84, %v26
    %v86 = vpop.permute.xlu0 %85
    %vm87 = vcmp.eq.s32.totalorder %v22, %v77
    %vm88 = vcmp.eq.s32.totalorder %v22, %v80
    %vm89 = vcmp.eq.s32.totalorder %v22, %v83
    %vm90 = vcmp.eq.s32.totalorder %v22, %v86
    %v91 = vsel %vm87, 1, 0
    %v92 = vsel %vm88, 1, 0
    %v93 = vsel %vm89, 1, 0
    %v94 = vsel %vm90, 1, 0
    %v95 = vcvt.s32.f32 %v91
    %v96 = vcvt.s32.f32 %v92
    %v97 = vcvt.s32.f32 %v93
    %v98 = vcvt.s32.f32 %v94
    %v99 = vld [vmem:[%s1] sm:$0xff]
    %v100 = vld [vmem:[%s1 + $0x8] sm:$0xff]
    %v101 = vld [vmem:[%s1 + $0x10] sm:$0xff]
    %v102 = vld [vmem:[%s1 + $0x18] sm:$0xff]
    %v103 = vld [vmem:[%s1 + $0x20] sm:$0xff]
    %v104 = vld [vmem:[%s1 + $0x28] sm:$0xff]
    %v105 = vld [vmem:[%s1 + $0x30] sm:$0xff]
    %v106 = vld [vmem:[%s1 + $0x38] sm:$0xff]
    %v107 = vld [vmem:[%s1 + $0x40] sm:$0xff]
    %v108 = vld [vmem:[%s1 + $0x48] sm:$0xff]
    %v109 = vld [vmem:[%s1 + $0x50] sm:$0xff]
    %v110 = vld [vmem:[%s1 + $0x58] sm:$0xff]
    %v111 = vld [vmem:[%s1 + $0x60] sm:$0xff]
    %v112 = vld [vmem:[%s1 + $0x68] sm:$0xff]
    %v113 = vld [vmem:[%s1 + $0x70] sm:$0xff]
    %v114 = vld [vmem:[%s1 + $0x78] sm:$0xff]
    %v115 = vld [vmem:[%s1 + $0x80] sm:$0xff]
    %v116 = vld [vmem:[%s1 + $0x88] sm:$0xff]
    %v117 = vld [vmem:[%s1 + $0x90] sm:$0xff]
    %v118 = vld [vmem:[%s1 + $0x98] sm:$0xff]
    %v119 = vld [vmem:[%s1 + $0xa0] sm:$0xff]
    %v120 = vld [vmem:[%s1 + $0xa8] sm:$0xff]
    %v121 = vld [vmem:[%s1 + $0xb0] sm:$0xff]
    %v122 = vld [vmem:[%s1 + $0xb8] sm:$0xff]
    %v123 = vld [vmem:[%s1 + $0xc0] sm:$0xff]
    %v124 = vld [vmem:[%s1 + $0xc8] sm:$0xff]
    %v125 = vld [vmem:[%s1 + $0xd0] sm:$0xff]
    %v126 = vld [vmem:[%s1 + $0xd8] sm:$0xff]
    %v127 = vld [vmem:[%s1 + $0xe0] sm:$0xff]
    %v128 = vld [vmem:[%s1 + $0xe8] sm:$0xff]
    %v129 = vld [vmem:[%s1 + $0xf0] sm:$0xff]
    %v130 = vld [vmem:[%s1 + $0xf8] sm:$0xff]
    %131 = vmatprep.subr.mxu0 %v100
    %132 = vmatpush1.msra.mxu0 %v99
    %133 = vmatprep.subr.mxu0 %v102
    %134 = vmatpush1.msra.mxu0 %v101
    %135 = vmatprep.subr.mxu0 %v104
    %136 = vmatpush1.msra.mxu0 %v103
    %137 = vmatprep.subr.mxu0 %v106
    %138 = vmatpush1.msra.mxu0 %v105
    %139 = vmatprep.subr.mxu0 %v108
    %140 = vmatpush1.msra.mxu0 %v107
    %141 = vmatprep.subr.mxu0 %v110
    %142 = vmatpush1.msra.mxu0 %v109
    %143 = vmatprep.subr.mxu0 %v112
    %144 = vmatpush1.msra.mxu0 %v111
    %145 = vmatprep.subr.mxu0 %v114
    %146 = vmatpush1.msra.mxu0 %v113
    %147 = vmatprep.subr.mxu0 %v116
    %148 = vmatpush1.msra.mxu0 %v115
    %149 = vmatprep.subr.mxu0 %v118
    %150 = vmatpush1.msra.mxu0 %v117
    %151 = vmatprep.subr.mxu0 %v120
    %152 = vmatpush1.msra.mxu0 %v119
    %153 = vmatprep.subr.mxu0 %v122
    %154 = vmatpush1.msra.mxu0 %v121
    %155 = vmatprep.subr.mxu0 %v124
    %156 = vmatpush1.msra.mxu0 %v123
    %157 = vmatprep.subr.mxu0 %v126
    %158 = vmatpush1.msra.mxu0 %v125
    %159 = vmatprep.subr.mxu0 %v128
    %160 = vmatpush1.msra.mxu0 %v127
    %161 = vmatprep.subr.mxu0 %v130
    %162 = vmatpush1.msra.mxu0 %v129
    %163 = vmatprep.subr.mxu0 0.0
    %164 = vmatpush1.msra.mxu0 0.0
    %165 = vmatprep.subr.mxu0 0.0
    %166 = vmatpush1.msra.mxu0 0.0
    %167 = vmatprep.subr.mxu0 0.0
    %168 = vmatpush1.msra.mxu0 0.0
    %169 = vmatprep.subr.mxu0 0.0
    %170 = vmatpush1.msra.mxu0 0.0
    %171 = vmatprep.subr.mxu0 0.0
    %172 = vmatpush1.msra.mxu0 0.0
    %173 = vmatprep.subr.mxu0 0.0
    %174 = vmatpush1.msra.mxu0 0.0
    %175 = vmatprep.subr.mxu0 0.0
    %176 = vmatpush1.msra.mxu0 0.0
    %177 = vmatprep.subr.mxu0 0.0
    %178 = vmatpush1.msra.mxu0 0.0
    %179 = vmatprep.subr.mxu0 0.0
    %180 = vmatpush1.msra.mxu0 0.0
    %181 = vmatprep.subr.mxu0 0.0
    %182 = vmatpush1.msra.mxu0 0.0
    %183 = vmatprep.subr.mxu0 0.0
    %184 = vmatpush1.msra.mxu0 0.0
    %185 = vmatprep.subr.mxu0 0.0
    %186 = vmatpush1.msra.mxu0 0.0
    %187 = vmatprep.subr.mxu0 0.0
    %188 = vmatpush1.msra.mxu0 0.0
    %189 = vmatprep.subr.mxu0 0.0
    %190 = vmatpush1.msra.mxu0 0.0
    %191 = vmatprep.subr.mxu0 0.0
    %192 = vmatpush1.msra.mxu0 0.0
    %193 = vmatprep.subr.mxu0 0.0
    %194 = vmatpush1.msra.mxu0 0.0
    %195 = vmatprep.mubr.f32.mxu0 0.0
    %196 = vmatmul.mubr.f32.gmra.mrb[0].mxu0 %v47
    %v197 = vpop.f32.mrb[0].mxu0
    %v198 = vadd.f32 0.0, %v197
    %v199 = vpop.f32.mrb[0].mxu0
    %v200 = vadd.f32 0.0, %v199
    %201 = vmatprep.mubr.f32.mxu0 0.0
    %202 = vmatmul.mubr.f32.gmra.mrb[0].mxu0 %v48
    %v203 = vpop.f32.mrb[0].mxu0
    %v204 = vadd.f32 0.0, %v203
    %v205 = vpop.f32.mrb[0].mxu0
    %v206 = vadd.f32 0.0, %v205
    %207 = vmatprep.mubr.f32.mxu0 0.0
    %208 = vmatmul.mubr.f32.gmra.mrb[0].mxu0 %v49
    %v209 = vpop.f32.mrb[0].mxu0
    %v210 = vadd.f32 0.0, %v209
    %v211 = vpop.f32.mrb[0].mxu0
    %v212 = vadd.f32 0.0, %v211
    %213 = vmatprep.mubr.f32.mxu0 0.0
    %214 = vmatmul.mubr.f32.gmra.mrb[0].mxu0 %v50
    %v215 = vpop.f32.mrb[0].mxu0
    %v216 = vadd.f32 0.0, %v215
    %v217 = vpop.f32.mrb[0].mxu0
    %v218 = vadd.f32 0.0, %v217
    %219 = vdwg.mxu0
    %v220 = vld [vmem:[%s2] sm:$0xff]
    %v221 = vld [vmem:[%s2 + $0x8] sm:$0xff]
    %v222 = vld [vmem:[%s2 + $0x10] sm:$0xff]
    %v223 = vld [vmem:[%s2 + $0x18] sm:$0xff]
    %v224 = vld [vmem:[%s2 + $0x20] sm:$0xff]
    %v225 = vld [vmem:[%s2 + $0x28] sm:$0xff]
    %v226 = vld [vmem:[%s2 + $0x30] sm:$0xff]
    %v227 = vld [vmem:[%s2 + $0x38] sm:$0xff]
    %v228 = vld [vmem:[%s2 + $0x40] sm:$0xff]
    %v229 = vld [vmem:[%s2 + $0x48] sm:$0xff]
    %v230 = vld [vmem:[%s2 + $0x50] sm:$0xff]
    %v231 = vld [vmem:[%s2 + $0x58] sm:$0xff]
    %v232 = vld [vmem:[%s2 + $0x60] sm:$0xff]
    %v233 = vld [vmem:[%s2 + $0x68] sm:$0xff]
    %v234 = vld [vmem:[%s2 + $0x70] sm:$0xff]
    %v235 = vld [vmem:[%s2 + $0x78] sm:$0xff]
    %v236 = vld [vmem:[%s2 + $0x80] sm:$0xff]
    %v237 = vld [vmem:[%s2 + $0x88] sm:$0xff]
    %v238 = vld [vmem:[%s2 + $0x90] sm:$0xff]
    %v239 = vld [vmem:[%s2 + $0x98] sm:$0xff]
    %v240 = vld [vmem:[%s2 + $0xa0] sm:$0xff]
    %v241 = vld [vmem:[%s2 + $0xa8] sm:$0xff]
    %v242 = vld [vmem:[%s2 + $0xb0] sm:$0xff]
    %v243 = vld [vmem:[%s2 + $0xb8] sm:$0xff]
    %v244 = vld [vmem:[%s2 + $0xc0] sm:$0xff]
    %v245 = vld [vmem:[%s2 + $0xc8] sm:$0xff]
    %v246 = vld [vmem:[%s2 + $0xd0] sm:$0xff]
    %v247 = vld [vmem:[%s2 + $0xd8] sm:$0xff]
    %v248 = vld [vmem:[%s2 + $0xe0] sm:$0xff]
    %v249 = vld [vmem:[%s2 + $0xe8] sm:$0xff]
    %v250 = vld [vmem:[%s2 + $0xf0] sm:$0xff]
    %v251 = vld [vmem:[%s2 + $0xf8] sm:$0xff]
    %252 = vmatprep.subr.mxu0 0.0
    %253 = vmatpush1.msra.mxu0 %v220
    %254 = vmatprep.subr.mxu0 0.0
    %255 = vmatpush1.msra.mxu0 %v221
    %256 = vmatprep.subr.mxu0 0.0
    %257 = vmatpush1.msra.mxu0 %v222
    %258 = vmatprep.subr.mxu0 0.0
    %259 = vmatpush1.msra.mxu0 %v223
    %260 = vmatprep.subr.mxu0 0.0
    %261 = vmatpush1.msra.mxu0 %v224
    %262 = vmatprep.subr.mxu0 0.0
    %263 = vmatpush1.msra.mxu0 %v225
    %264 = vmatprep.subr.mxu0 0.0
    %265 = vmatpush1.msra.mxu0 %v226
    %266 = vmatprep.subr.mxu0 0.0
    %267 = vmatpush1.msra.mxu0 %v227
    %268 = vmatprep.subr.mxu0 0.0
    %269 = vmatpush1.msra.mxu0 %v228
    %270 = vmatprep.subr.mxu0 0.0
    %271 = vmatpush1.msra.mxu0 %v229
    %272 = vmatprep.subr.mxu0 0.0
    %273 = vmatpush1.msra.mxu0 %v230
    %274 = vmatprep.subr.mxu0 0.0
    %275 = vmatpush1.msra.mxu0 %v231
    %276 = vmatprep.subr.mxu0 0.0
    %277 = vmatpush1.msra.mxu0 %v232
    %278 = vmatprep.subr.mxu0 0.0
    %279 = vmatpush1.msra.mxu0 %v233
    %280 = vmatprep.subr.mxu0 0.0
    %281 = vmatpush1.msra.mxu0 %v234
    %282 = vmatprep.subr.mxu0 0.0
    %283 = vmatpush1.msra.mxu0 %v235
    %284 = vmatprep.subr.mxu0 0.0
    %285 = vmatpush1.msra.mxu0 %v236
    %286 = vmatprep.subr.mxu0 0.0
    %287 = vmatpush1.msra.mxu0 %v237
    %288 = vmatprep.subr.mxu0 0.0
    %289 = vmatpush1.msra.mxu0 %v238
    %290 = vmatprep.subr.mxu0 0.0
    %291 = vmatpush1.msra.mxu0 %v239
    %292 = vmatprep.subr.mxu0 0.0
    %293 = vmatpush1.msra.mxu0 %v240
    %294 = vmatprep.subr.mxu0 0.0
    %295 = vmatpush1.msra.mxu0 %v241
    %296 = vmatprep.subr.mxu0 0.0
    %297 = vmatpush1.msra.mxu0 %v242
    %298 = vmatprep.subr.mxu0 0.0
    %299 = vmatpush1.msra.mxu0 %v243
    %300 = vmatprep.subr.mxu0 0.0
    %301 = vmatpush1.msra.mxu0 %v244
    %302 = vmatprep.subr.mxu0 0.0
    %303 = vmatpush1.msra.mxu0 %v245
    %304 = vmatprep.subr.mxu0 0.0
    %305 = vmatpush1.msra.mxu0 %v246
    %306 = vmatprep.subr.mxu0 0.0
    %307 = vmatpush1.msra.mxu0 %v247
    %308 = vmatprep.subr.mxu0 0.0
    %309 = vmatpush1.msra.mxu0 %v248
    %310 = vmatprep.subr.mxu0 0.0
    %311 = vmatpush1.msra.mxu0 %v249
    %312 = vmatprep.subr.mxu0 0.0
    %313 = vmatpush1.msra.mxu0 %v250
    %314 = vmatprep.subr.mxu0 0.0
    %315 = vmatpush1.msra.mxu0 %v251
    %316 = vmatprep.mubr.f32.mxu0 %v95
    %317 = vmatmul.mubr.f32.gmra.mrb[0].mxu0 %v71
    %v318 = vpop.f32.mrb[0].mxu0
    %v319 = vadd.f32 0.0, %v318
    %v320 = vpop.f32.mrb[0].mxu0
    %321 = vmatprep.mubr.f32.mxu0 %v96
    %322 = vmatmul.mubr.f32.gmra.mrb[0].mxu0 %v72
    %v323 = vpop.f32.mrb[0].mxu0
    %v324 = vadd.f32 0.0, %v323
    %v325 = vpop.f32.mrb[0].mxu0
    %326 = vmatprep.mubr.f32.mxu0 %v97
    %327 = vmatmul.mubr.f32.gmra.mrb[0].mxu0 %v73
    %v328 = vpop.f32.mrb[0].mxu0
    %v329 = vadd.f32 0.0, %v328
    %v330 = vpop.f32.mrb[0].mxu0
    %331 = vmatprep.mubr.f32.mxu0 %v98
    %332 = vmatmul.mubr.f32.gmra.mrb[0].mxu0 %v74
    %v333 = vpop.f32.mrb[0].mxu0
    %v334 = vadd.f32 0.0, %v333
    %v335 = vpop.f32.mrb[0].mxu0
    %336 = vdwg.mxu0
    %v337 = vadd.f32 %v198, %v319
    %v338 = vadd.f32 %v204, %v324
    %v339 = vadd.f32 %v210, %v329
    %v340 = vadd.f32 %v216, %v334
    %v341 = vld [vmem:[%s3] ss:$8 sm:$0x3]
    %v343 = vlaneseq
    %v344 = vshrl.u32 %v343, 7
    %v345 = vsub.s32 0, %v344
    %v346 = vrot.slane %v341, %v345
    %v347 = vlaneseq
    %v348 = vshrl.u32 %v347, 7
    %v349 = vsub.s32 1, %v348
    %v350 = vrot.slane %v341, %v349
    %v353 = vadd.f32 %v337, %v346
    %v354 = vadd.f32 %v200, %v350
    %v355 = vadd.f32 %v338, %v346
    %v356 = vadd.f32 %v206, %v350
    %v357 = vadd.f32 %v339, %v346
    %v358 = vadd.f32 %v212, %v350
    %v359 = vadd.f32 %v340, %v346
    %v360 = vadd.f32 %v218, %v350
    %v361 = vmax.f32 %v353, 0.0
    %v362 = vmax.f32 %v354, 0.0
    %v363 = vmax.f32 %v355, 0.0
    %v364 = vmax.f32 %v356, 0.0
    %v365 = vmax.f32 %v357, 0.0
    %v366 = vmax.f32 %v358, 0.0
    %v367 = vmax.f32 %v359, 0.0
    %v368 = vmax.f32 %v360, 0.0
    %v369 = vld [vmem:[%s4] sm:$0xff]
    %v370 = vld [vmem:[%s4 + $0x8] sm:$0xff]
    %v371 = vld [vmem:[%s4 + $0x10] sm:$0xff]
    %v372 = vld [vmem:[%s4 + $0x18] sm:$0xff]
    %v373 = vmul.f32 %v361, %v369
    %v374 = vmul.f32 %v362, %v370
    %v375 = vmul.f32 %v363, %v371
    %v376 = vmul.f32 %v364, %v372
    %v377 = vmul.f32 %v365, %v369
    %v378 = vmul.f32 %v366, %v370
    %v379 = vmul.f32 %v367, %v371
    %v380 = vmul.f32 %v368, %v372
    %v381 = vmax.f32 %v373, %v375
    %v382 = vrot.slane %v381, 4
    %v383 = vmax.f32 %v381, %v382
    %v384 = vrot.slane %v383, 2
    %v385 = vmax.f32 %v383, %v384
    %v386 = vrot.slane %v385, 1
    %v387 = vmax.f32 %v385, %v386
    %vm388 = vcmask 523264
    %v389 = vsel %vm388, %v374, -inf
    %v390 = vsel %vm388, %v376, -inf
    %v391 = vmax.f32 %v389, %v390
    %v392 = vrot.slane %v391, 4
    %v393 = vmax.f32 %v391, %v392
    %v394 = vrot.slane %v393, 2
    %v395 = vmax.f32 %v393, %v394
    %v396 = vrot.slane %v395, 1
    %v397 = vmax.f32 %v395, %v396
    %v398 = vmax.f32 %v377, %v379
    %v399 = vrot.slane %v398, 4
    %v400 = vmax.f32 %v398, %v399
    %v401 = vrot.slane %v400, 2
    %v402 = vmax.f32 %v400, %v401
    %v403 = vrot.slane %v402, 1
    %v404 = vmax.f32 %v402, %v403
    %v405 = vsel %vm388, %v378, -inf
    %v406 = vsel %vm388, %v380, -inf
    %v407 = vmax.f32 %v405, %v406
    %v408 = vrot.slane %v407, 4
    %v409 = vmax.f32 %v407, %v408
    %v410 = vrot.slane %v409, 2
    %v411 = vmax.f32 %v409, %v410
    %v412 = vrot.slane %v411, 1
    %v413 = vmax.f32 %v411, %v412
    %v414 = vld [vmem:[%s3] sm:$0x6]
    %v415 = vld [vmem:[%s3 + $0x8] sm:$0x6]
    %v416 = vmul.f32 %v387, %v414
    %v417 = vmul.f32 %v397, %v415
    %v418 = vmul.f32 %v404, %v414
    %v419 = vmul.f32 %v413, %v415
    %vm420 = vcmask 1042433
    %v421 = vsel %vm420, %v416, 0.0
    %vm422 = vcmask 518145
    %v423 = vsel %vm422, %v417, 0.0
    %v424 = vadd.f32 %v421, %v423
    %425 = vadd.xlane.f32.xlu0 %v424
    %v426 = vpop.xlane.xlu0 %425
    %v427 = vsel %vm420, %v418, 0.0
    %v428 = vsel %vm422, %v419, 0.0
    %v429 = vadd.f32 %v427, %v428
    %430 = vadd.xlane.f32.xlu0 %v429
    %v431 = vpop.xlane.xlu0 %430
    %v432 = vld [vmem:[%s3 + $0x3] ss:$0 sm:$0xff]
    %s435 = sor.u32 256, 255
    %436 = vbcast.lane.b32.xlu0 %v432, %s435
    %v437 = vpop.permute.xlu0 %436
    %v439 = vadd.f32 %v426, %v437
    %v440 = vadd.f32 %v431, %v437
    %443 = vset.pattern.permute.xlu0 0
    %444 = vperm.xlu0 %443, %v439
    %v445 = vpop.permute.xlu0 %444
    %446 = vset.pattern.permute.xlu0 0
    %447 = vperm.xlu0 %446, %v440
    %v448 = vpop.permute.xlu0 %447
    %v449 = vlaneseq
    %v450 = vshrl.u32 %v449, 7
    %v451 = vsub.s32 %v22, %v450
    %v452 = vrot.slane %v445, %v451
    %v453 = vlaneseq
    %v454 = vshrl.u32 %v453, 7
    %v455 = vsub.s32 %v22, %v454
    %v456 = vrot.slane %v448, %v455
    %vm457 = vcmask 1041409
    %v458 = vsel %vm457, %v456, %v452
    %vm460 = vcmask 17416
    %v461 = vsel %vm460, %v458, -inf
    %462 = vmax.xlane.f32.xlu0 %v461
    %v463 = vpop.xlane.xlu0 %462
    %v465 = vlaneseq
    %v466 = vshrl.u32 %v465, 7
    %v467 = vsub.s32 0, %v466
    %v468 = vrot.slane %v463, %v467
    %v469 = vlaneseq
    %v470 = vshrl.u32 %v469, 7
    %v471 = vsub.s32 1, %v470
    %v472 = vrot.slane %v463, %v471
    %v475 = vsub.f32 %v439, %v468
    %v476 = vsub.f32 %v440, %v472
    %v477 = vmul.f32 %v475, 1.442695
    %v478 = vpow.pop %v477
    %v479 = vmul.f32 %v476, 1.442695
    %v480 = vpow.pop %v479
    %483 = vset.pattern.permute.xlu0 0
    %484 = vperm.xlu0 %483, %v478
    %v485 = vpop.permute.xlu0 %484
    %486 = vset.pattern.permute.xlu0 0
    %487 = vperm.xlu0 %486, %v480
    %v488 = vpop.permute.xlu0 %487
    %v489 = vadd.s32 %v22, 1
    %v490 = vlaneseq
    %v491 = vshrl.u32 %v490, 7
    %v492 = vsub.s32 %v489, %v491
    %v493 = vrot.slane %v485, %v492
    %v494 = vlaneseq
    %v495 = vshrl.u32 %v494, 7
    %v496 = vsub.s32 %v489, %v495
    %v497 = vrot.slane %v488, %v496
    %v498 = vsel %vm457, %v497, %v493
    %vm500 = vcmask 9216
    %v501 = vsel %vm500, %v498, 0.0
    %502 = vadd.xlane.f32.xlu0 %v501
    %v503 = vpop.xlane.xlu0 %502
    %v504 = vlog2.pop %v503
    %v505 = vmul.f32 %v504, 0.6931472
    %v507 = vlaneseq
    %v508 = vshrl.u32 %v507, 7
    %v509 = vsub.s32 0, %v508
    %v510 = vrot.slane %v505, %v509
    %v511 = vlaneseq
    %v512 = vshrl.u32 %v511, 7
    %v513 = vsub.s32 1, %v512
    %v514 = vrot.slane %v505, %v513
    %v517 = vsub.f32 %v475, %v510
    %v518 = vsub.f32 %v476, %v514
    %521 = vset.pattern.permute.xlu0 0
    %522 = vperm.xlu0 %521, %v517
    %v523 = vpop.permute.xlu0 %522
    %524 = vset.pattern.permute.xlu0 0
    %525 = vperm.xlu0 %524, %v518
    %v526 = vpop.permute.xlu0 %525
    %v527 = vlaneseq
    %v528 = vshrl.u32 %v527, 7
    %v529 = vsub.s32 %v489, %v528
    %v530 = vrot.slane %v523, %v529
    %v531 = vlaneseq
    %v532 = vshrl.u32 %v531, 7
    %v533 = vsub.s32 %v489, %v532
    %v534 = vrot.slane %v526, %v533
    %vm535 = vcmask 1042434
    %v536 = vsel %vm535, %v534, %v530
    %vm538 = vcmask 10241
    %539 = vst.msk [vmem:[#allocation2 - $0x1] sm:$0x6] %vm538, %v536
    // Predicated region
    $region22: #{textcnn_forward.1} parent=1 // pred_check
      _
    $region23: #{textcnn_forward.1} parent=1 // pred_check_branch
      %541 = sbr.rel (0) target = $region25
    $region24: #{textcnn_forward.1} parent=1 // pred_region
      %s543 = ssub.s32 32, 32
      %544 = vsyncadd [#allocation3], %s543
      %s546 = sshll.u32 [#allocation2], 4
      %s547 = int_to_ptr.vmem [resolvable:$true] %s546
      %549 = dma.vmem_to_hbm [thread:$0]  %s547, 32, %s5, [#allocation3]
    $region25: #{textcnn_forward.1} parent=1 // pred_fallthru
      _
    // Predicated region
    $region26: #{textcnn_forward.1} parent=1 // pred_check
      _
    $region27: #{textcnn_forward.1} parent=1 // pred_check_branch
      %551 = sbr.rel (0) target = $region29
    $region28: #{textcnn_forward.1} parent=1 // pred_region
      %552 = dma.done [#allocation3], 32
    $region29: #{textcnn_forward.1} parent=1 // pred_fallthru
      _
    %553 = vsyncpa [#allocation3], 1

</llo_original>
